<compile_context>
chip_gen: v7x
topology: tpu7x:2x2x1
jax: 0.10.0
libtpu: 0.0.40
codegen_flags: <defaults>
</compile_context>

<pallas_src>
import functools

import jax
import jax.numpy as jnp
from jax.experimental import pallas as pl
from jax.experimental.pallas import tpu as pltpu


def lstm_kernel(x_ref, wih_ref, whh_ref, bias_ref, wfc_ref, bfc_ref, out_ref,
                *, hidden_size, seq_len, batch):
    H = hidden_size
    T = seq_len
    B = batch
    G = 4 * H

    # (1) Input projection for ALL timesteps, hoisted out of the recurrence:
    #     one (B*T, I) @ (I, 4H) MXU matmul + fused (b_ih + b_hh).
    xproj = (jnp.dot(x_ref[...], wih_ref[...],
                     preferred_element_type=jnp.float32)
             + bias_ref[...])                       # (B*T, 4H), row = b*T + t
    # Re-view as (B, T, 4H). With T == 8 this splits the sublane dim exactly
    # on vreg-tile boundaries (pure metadata change); the per-step slice below
    # stays in vregs instead of requiring strided VMEM loads.
    xproj = xproj.reshape(B, T, G)

    whh = whh_ref[...]                              # (H, 4H), loop-invariant
    # TODO(synk): at realistic H, keep W_hh resident in the MXU across steps
    # via pltpu.matmul_push_rhs / matmul_acc_lhs instead of jnp.dot per step.

    h = jnp.zeros((B, H), jnp.float32)
    c = jnp.zeros((B, H), jnp.float32)

    # (2) Serial recurrence, fully unrolled (T small and static); h/c are
    #     vreg-resident Python-loop carries, never round-tripped through VMEM.
    for t in range(T):
        z = xproj[:, t, :] + jnp.dot(h, whh, preferred_element_type=jnp.float32)
        # Two full-width (4H lanes) EUP passes, then static lane slices of the
        # quarters.  PyTorch gate order: [i, f, g, o].
        sz = jax.nn.sigmoid(z)
        tz = jnp.tanh(z)
        i_g = sz[:, 0 * H:1 * H]
        f_g = sz[:, 1 * H:2 * H]
        g_g = tz[:, 2 * H:3 * H]
        o_g = sz[:, 3 * H:4 * H]
        c = f_g * c + i_g * g_g
        h = o_g * jnp.tanh(c)

    # (3) Fused fc (output_size == 1): VPU multiply + lane reduce, not an MXU
    #     op; writes the (B, 1) result directly (single masked store).
    out_ref[...] = (jnp.sum(h * wfc_ref[...], axis=-1, keepdims=True)
                    + bfc_ref[...])


def prepare_params(params):
    """One-time weight re-layouts (outside the per-call hot path)."""
    return {
        "wih_t": params["w_ih"].T,                            # (I, 4H)
        "whh_t": params["w_hh"].T,                            # (H, 4H)
        "bias": (params["b_ih"] + params["b_hh"])[None, :],   # (1, 4H)
        "wfc": params["w_fc"],                                # (O=1, H)
        "bfc": params["b_fc"].reshape(1, 1),                  # (1, 1)
    }
    # TODO(synk): at realistic sizes, also cast wih_t/whh_t (and x) to
    # bfloat16 here for the MXU matmuls, keeping gate math + h/c in f32
    # (strictly f32 elementwise on v5e, which has no bf16 VPU/EUP).


@jax.jit
def mylstm_forward(x, prep):
    """x: (B, T, I) float32. Returns fc(hidden) with shape (num_layers=1, B, 1)."""
    B, T, I = x.shape
    H = prep["whh_t"].shape[0]
    G = 4 * H
    O = prep["wfc"].shape[0]
    assert O == 1  # TODO(synk): generalize the fused fc for output_size > 1.

    # Free, row-major reshape (no transpose / pad / copy): row = b*T + t.
    x_flat = x.reshape(B * T, I)
    # TODO(synk): pad I to a sublane multiple (7 -> 8) if I grows; at I=7 the
    # one-shot masked load is cheaper than an extra host-side pad/copy.

    kernel = functools.partial(
        lstm_kernel, hidden_size=H, seq_len=T, batch=B)

    out = pl.pallas_call(
        kernel,
        out_shape=jax.ShapeDtypeStruct((B, O), jnp.float32),
        grid=(1,),
        in_specs=[
            pl.BlockSpec((B * T, I), lambda i: (0, 0)),   # x, batch-major flat
            pl.BlockSpec((I, G), lambda i: (0, 0)),       # W_ih^T
            pl.BlockSpec((H, G), lambda i: (0, 0)),       # W_hh^T
            pl.BlockSpec((1, G), lambda i: (0, 0)),       # b_ih + b_hh
            pl.BlockSpec((O, H), lambda i: (0, 0)),       # fc weight row
            pl.BlockSpec((O, O), lambda i: (0, 0)),       # fc bias
        ],
        out_specs=pl.BlockSpec((B, O), lambda i: (0, 0)),
        compiler_params=pltpu.CompilerParams(
            dimension_semantics=("arbitrary",)),
        # TODO(synk): for realistic T/H/B, switch to a T-chunked grid with h/c
        # carried in persistent VMEM scratch (bounds VMEM for v7x's 64 MiB),
        # add a leading 'parallel' batch axis for v7x's 2 TensorCores, and set
        # vmem_limit_bytes explicitly.
    )(x_flat, prep["wih_t"], prep["whh_t"], prep["bias"],
      prep["wfc"], prep["bfc"])

    return out[None, :, :]   # (num_layers=1, B, O)


def mylstm_reference(x, params):
    """Pure-JAX reference matching nn.LSTM + nn.Linear semantics."""
    B, T, I = x.shape
    H = params["w_hh"].shape[1]
    wih_t = params["w_ih"].T
    whh_t = params["w_hh"].T
    b = params["b_ih"] + params["b_hh"]

    def step(carry, x_t):
        h, c = carry
        z = x_t @ wih_t + h @ whh_t + b
        i_g = jax.nn.sigmoid(z[:, 0 * H:1 * H])
        f_g = jax.nn.sigmoid(z[:, 1 * H:2 * H])
        g_g = jnp.tanh(z[:, 2 * H:3 * H])
        o_g = jax.nn.sigmoid(z[:, 3 * H:4 * H])
        c = f_g * c + i_g * g_g
        h = o_g * jnp.tanh(c)
        return (h, c), h

    h0 = jnp.zeros((B, H), jnp.float32)
    c0 = jnp.zeros((B, H), jnp.float32)
    (h_final, _), _ = jax.lax.scan(step, (h0, c0), jnp.swapaxes(x, 0, 1))
    out = h_final @ params["w_fc"].T + params["b_fc"]
    return out[None, :, :]


def init_params(key, input_size, hidden_size, output_size):
    k = 1.0 / jnp.sqrt(hidden_size)
    keys = jax.random.split(key, 6)
    u = lambda kk, shape, bound: jax.random.uniform(
        kk, shape, jnp.float32, minval=-bound, maxval=bound)
    return {
        "w_ih": u(keys[0], (4 * hidden_size, input_size), k),
        "w_hh": u(keys[1], (4 * hidden_size, hidden_size), k),
        "b_ih": u(keys[2], (4 * hidden_size,), k),
        "b_hh": u(keys[3], (4 * hidden_size,), k),
        "w_fc": u(keys[4], (output_size, hidden_size), k),
        "b_fc": u(keys[5], (output_size,), k),
    }


if __name__ == "__main__":
    INPUT_SIZE, HIDDEN_SIZE, OUTPUT_SIZE = 7, 32, 1
    B, T = 2, 8

    key = jax.random.PRNGKey(0)
    k_x, k_p = jax.random.split(key)
    x = jax.random.normal(k_x, (B, T, INPUT_SIZE), jnp.float32)
    params = init_params(k_p, INPUT_SIZE, HIDDEN_SIZE, OUTPUT_SIZE)
    prep = prepare_params(params)

    out = mylstm_forward(x, prep)
    out = jax.block_until_ready(out)

    ref = mylstm_reference(x, params)
    assert out.shape == (1, B, OUTPUT_SIZE), out.shape
    assert jnp.allclose(out, ref, atol=1e-5, rtol=1e-5), (out, ref)

    print("KERNEL_OK")
</pallas_src>

<mosaic_0001>
module attributes {stable_mosaic.version = 11 : i64} {
  func.func @lstm_kernel(%arg0: i32, %arg1: memref<16x7xf32, #tpu.memory_space<vmem>>, %arg2: memref<7x128xf32, #tpu.memory_space<vmem>>, %arg3: memref<32x128xf32, #tpu.memory_space<vmem>>, %arg4: memref<1x128xf32, #tpu.memory_space<vmem>>, %arg5: memref<1x32xf32, #tpu.memory_space<vmem>>, %arg6: memref<1x1xf32, #tpu.memory_space<vmem>>, %arg7: memref<2x1xf32, #tpu.memory_space<vmem>>) attributes {dimension_semantics = [#tpu.dimension_semantics<arbitrary>], iteration_bounds = array<i64: 1>, scalar_prefetch = 0 : i64, scratch_operands = 0 : i64, tpu.core_type = #tpu.core_type<tc>, window_params = [{pipeline_mode = #tpu.pipeline_mode<synchronous>, transform_indices = @transform_0, window_bounds = array<i64: 16, 7>}, {pipeline_mode = #tpu.pipeline_mode<synchronous>, transform_indices = @transform_1, window_bounds = array<i64: 7, 128>}, {pipeline_mode = #tpu.pipeline_mode<synchronous>, transform_indices = @transform_2, window_bounds = array<i64: 32, 128>}, {pipeline_mode = #tpu.pipeline_mode<synchronous>, transform_indices = @transform_3, window_bounds = array<i64: 1, 128>}, {pipeline_mode = #tpu.pipeline_mode<synchronous>, transform_indices = @transform_4, window_bounds = array<i64: 1, 32>}, {pipeline_mode = #tpu.pipeline_mode<synchronous>, transform_indices = @transform_5, window_bounds = array<i64: 1, 1>}, {pipeline_mode = #tpu.pipeline_mode<synchronous>, transform_indices = @transform_6, window_bounds = array<i64: 2, 1>}]} {
    %c0 = arith.constant 0 : index
    %c0_0 = arith.constant 0 : index
    %0 = vector.load %arg1[%c0, %c0_0] : memref<16x7xf32, #tpu.memory_space<vmem>>, vector<16x7xf32>
    %c0_1 = arith.constant 0 : index
    %c0_2 = arith.constant 0 : index
    %1 = vector.load %arg2[%c0_1, %c0_2] : memref<7x128xf32, #tpu.memory_space<vmem>>, vector<7x128xf32>
    %cst = arith.constant dense<0.000000e+00> : vector<16x128xf32>
    %2 = tpu.matmul %0, %1, %cst {dimension_numbers = #tpu.dot_dimension_numbers<[1], [0], [0], [1], [0, 0, 1, 1], [], []>} : vector<16x7xf32>, vector<7x128xf32>, vector<16x128xf32> -> vector<16x128xf32>
    %c0_3 = arith.constant 0 : index
    %c0_4 = arith.constant 0 : index
    %3 = vector.load %arg4[%c0_3, %c0_4] : memref<1x128xf32, #tpu.memory_space<vmem>>, vector<1x128xf32>
    %4 = vector.broadcast %3 : vector<1x128xf32> to vector<16x128xf32>
    %5 = arith.addf %2, %4 : vector<16x128xf32>
    %6 = vector.shape_cast %5 : vector<16x128xf32> to vector<2x8x128xf32>
    %c0_5 = arith.constant 0 : index
    %c0_6 = arith.constant 0 : index
    %7 = vector.load %arg3[%c0_5, %c0_6] : memref<32x128xf32, #tpu.memory_space<vmem>>, vector<32x128xf32>
    %cst_7 = arith.constant 0.000000e+00 : f32
    %8 = vector.broadcast %cst_7 : f32 to vector<2x32xf32>
    %cst_8 = arith.constant 0.000000e+00 : f32
    %9 = vector.broadcast %cst_8 : f32 to vector<2x32xf32>
    %10 = vector.extract_strided_slice %6 {offsets = [0, 0, 0], sizes = [2, 1, 128], strides = [1, 1, 1]} : vector<2x8x128xf32> to vector<2x1x128xf32>
    %11 = vector.shape_cast %10 : vector<2x1x128xf32> to vector<2x128xf32>
    %cst_9 = arith.constant dense<0.000000e+00> : vector<2x128xf32>
    %12 = tpu.matmul %8, %7, %cst_9 {dimension_numbers = #tpu.dot_dimension_numbers<[1], [0], [0], [1], [0, 0, 1, 1], [], []>} : vector<2x32xf32>, vector<32x128xf32>, vector<2x128xf32> -> vector<2x128xf32>
    %13 = arith.addf %11, %12 : vector<2x128xf32>
    %14 = arith.negf %13 : vector<2x128xf32>
    %15 = math.exp %14 : vector<2x128xf32>
    %cst_10 = arith.constant 1.000000e+00 : f32
    %16 = vector.broadcast %cst_10 : f32 to vector<2x128xf32>
    %17 = arith.addf %16, %15 : vector<2x128xf32>
    %18 = arith.divf %16, %17 : vector<2x128xf32>
    %19 = math.tanh %13 : vector<2x128xf32>
    %20 = vector.extract_strided_slice %18 {offsets = [0, 0], sizes = [2, 32], strides = [1, 1]} : vector<2x128xf32> to vector<2x32xf32>
    %21 = vector.extract_strided_slice %18 {offsets = [0, 32], sizes = [2, 32], strides = [1, 1]} : vector<2x128xf32> to vector<2x32xf32>
    %22 = vector.extract_strided_slice %19 {offsets = [0, 64], sizes = [2, 32], strides = [1, 1]} : vector<2x128xf32> to vector<2x32xf32>
    %23 = vector.extract_strided_slice %18 {offsets = [0, 96], sizes = [2, 32], strides = [1, 1]} : vector<2x128xf32> to vector<2x32xf32>
    %24 = arith.mulf %21, %9 : vector<2x32xf32>
    %25 = arith.mulf %20, %22 : vector<2x32xf32>
    %26 = arith.addf %24, %25 : vector<2x32xf32>
    %27 = math.tanh %26 : vector<2x32xf32>
    %28 = arith.mulf %23, %27 : vector<2x32xf32>
    %29 = vector.extract_strided_slice %6 {offsets = [0, 1, 0], sizes = [2, 1, 128], strides = [1, 1, 1]} : vector<2x8x128xf32> to vector<2x1x128xf32>
    %30 = vector.shape_cast %29 : vector<2x1x128xf32> to vector<2x128xf32>
    %cst_11 = arith.constant dense<0.000000e+00> : vector<2x128xf32>
    %31 = tpu.matmul %28, %7, %cst_11 {dimension_numbers = #tpu.dot_dimension_numbers<[1], [0], [0], [1], [0, 0, 1, 1], [], []>} : vector<2x32xf32>, vector<32x128xf32>, vector<2x128xf32> -> vector<2x128xf32>
    %32 = arith.addf %30, %31 : vector<2x128xf32>
    %33 = arith.negf %32 : vector<2x128xf32>
    %34 = math.exp %33 : vector<2x128xf32>
    %cst_12 = arith.constant 1.000000e+00 : f32
    %35 = vector.broadcast %cst_12 : f32 to vector<2x128xf32>
    %36 = arith.addf %35, %34 : vector<2x128xf32>
    %37 = arith.divf %35, %36 : vector<2x128xf32>
    %38 = math.tanh %32 : vector<2x128xf32>
    %39 = vector.extract_strided_slice %37 {offsets = [0, 0], sizes = [2, 32], strides = [1, 1]} : vector<2x128xf32> to vector<2x32xf32>
    %40 = vector.extract_strided_slice %37 {offsets = [0, 32], sizes = [2, 32], strides = [1, 1]} : vector<2x128xf32> to vector<2x32xf32>
    %41 = vector.extract_strided_slice %38 {offsets = [0, 64], sizes = [2, 32], strides = [1, 1]} : vector<2x128xf32> to vector<2x32xf32>
    %42 = vector.extract_strided_slice %37 {offsets = [0, 96], sizes = [2, 32], strides = [1, 1]} : vector<2x128xf32> to vector<2x32xf32>
    %43 = arith.mulf %40, %26 : vector<2x32xf32>
    %44 = arith.mulf %39, %41 : vector<2x32xf32>
    %45 = arith.addf %43, %44 : vector<2x32xf32>
    %46 = math.tanh %45 : vector<2x32xf32>
    %47 = arith.mulf %42, %46 : vector<2x32xf32>
    %48 = vector.extract_strided_slice %6 {offsets = [0, 2, 0], sizes = [2, 1, 128], strides = [1, 1, 1]} : vector<2x8x128xf32> to vector<2x1x128xf32>
    %49 = vector.shape_cast %48 : vector<2x1x128xf32> to vector<2x128xf32>
    %cst_13 = arith.constant dense<0.000000e+00> : vector<2x128xf32>
    %50 = tpu.matmul %47, %7, %cst_13 {dimension_numbers = #tpu.dot_dimension_numbers<[1], [0], [0], [1], [0, 0, 1, 1], [], []>} : vector<2x32xf32>, vector<32x128xf32>, vector<2x128xf32> -> vector<2x128xf32>
    %51 = arith.addf %49, %50 : vector<2x128xf32>
    %52 = arith.negf %51 : vector<2x128xf32>
    %53 = math.exp %52 : vector<2x128xf32>
    %cst_14 = arith.constant 1.000000e+00 : f32
    %54 = vector.broadcast %cst_14 : f32 to vector<2x128xf32>
    %55 = arith.addf %54, %53 : vector<2x128xf32>
    %56 = arith.divf %54, %55 : vector<2x128xf32>
    %57 = math.tanh %51 : vector<2x128xf32>
    %58 = vector.extract_strided_slice %56 {offsets = [0, 0], sizes = [2, 32], strides = [1, 1]} : vector<2x128xf32> to vector<2x32xf32>
    %59 = vector.extract_strided_slice %56 {offsets = [0, 32], sizes = [2, 32], strides = [1, 1]} : vector<2x128xf32> to vector<2x32xf32>
    %60 = vector.extract_strided_slice %57 {offsets = [0, 64], sizes = [2, 32], strides = [1, 1]} : vector<2x128xf32> to vector<2x32xf32>
    %61 = vector.extract_strided_slice %56 {offsets = [0, 96], sizes = [2, 32], strides = [1, 1]} : vector<2x128xf32> to vector<2x32xf32>
    %62 = arith.mulf %59, %45 : vector<2x32xf32>
    %63 = arith.mulf %58, %60 : vector<2x32xf32>
    %64 = arith.addf %62, %63 : vector<2x32xf32>
    %65 = math.tanh %64 : vector<2x32xf32>
    %66 = arith.mulf %61, %65 : vector<2x32xf32>
    %67 = vector.extract_strided_slice %6 {offsets = [0, 3, 0], sizes = [2, 1, 128], strides = [1, 1, 1]} : vector<2x8x128xf32> to vector<2x1x128xf32>
    %68 = vector.shape_cast %67 : vector<2x1x128xf32> to vector<2x128xf32>
    %cst_15 = arith.constant dense<0.000000e+00> : vector<2x128xf32>
    %69 = tpu.matmul %66, %7, %cst_15 {dimension_numbers = #tpu.dot_dimension_numbers<[1], [0], [0], [1], [0, 0, 1, 1], [], []>} : vector<2x32xf32>, vector<32x128xf32>, vector<2x128xf32> -> vector<2x128xf32>
    %70 = arith.addf %68, %69 : vector<2x128xf32>
    %71 = arith.negf %70 : vector<2x128xf32>
    %72 = math.exp %71 : vector<2x128xf32>
    %cst_16 = arith.constant 1.000000e+00 : f32
    %73 = vector.broadcast %cst_16 : f32 to vector<2x128xf32>
    %74 = arith.addf %73, %72 : vector<2x128xf32>
    %75 = arith.divf %73, %74 : vector<2x128xf32>
    %76 = math.tanh %70 : vector<2x128xf32>
    %77 = vector.extract_strided_slice %75 {offsets = [0, 0], sizes = [2, 32], strides = [1, 1]} : vector<2x128xf32> to vector<2x32xf32>
    %78 = vector.extract_strided_slice %75 {offsets = [0, 32], sizes = [2, 32], strides = [1, 1]} : vector<2x128xf32> to vector<2x32xf32>
    %79 = vector.extract_strided_slice %76 {offsets = [0, 64], sizes = [2, 32], strides = [1, 1]} : vector<2x128xf32> to vector<2x32xf32>
    %80 = vector.extract_strided_slice %75 {offsets = [0, 96], sizes = [2, 32], strides = [1, 1]} : vector<2x128xf32> to vector<2x32xf32>
    %81 = arith.mulf %78, %64 : vector<2x32xf32>
    %82 = arith.mulf %77, %79 : vector<2x32xf32>
    %83 = arith.addf %81, %82 : vector<2x32xf32>
    %84 = math.tanh %83 : vector<2x32xf32>
    %85 = arith.mulf %80, %84 : vector<2x32xf32>
    %86 = vector.extract_strided_slice %6 {offsets = [0, 4, 0], sizes = [2, 1, 128], strides = [1, 1, 1]} : vector<2x8x128xf32> to vector<2x1x128xf32>
    %87 = vector.shape_cast %86 : vector<2x1x128xf32> to vector<2x128xf32>
    %cst_17 = arith.constant dense<0.000000e+00> : vector<2x128xf32>
    %88 = tpu.matmul %85, %7, %cst_17 {dimension_numbers = #tpu.dot_dimension_numbers<[1], [0], [0], [1], [0, 0, 1, 1], [], []>} : vector<2x32xf32>, vector<32x128xf32>, vector<2x128xf32> -> vector<2x128xf32>
    %89 = arith.addf %87, %88 : vector<2x128xf32>
    %90 = arith.negf %89 : vector<2x128xf32>
    %91 = math.exp %90 : vector<2x128xf32>
    %cst_18 = arith.constant 1.000000e+00 : f32
    %92 = vector.broadcast %cst_18 : f32 to vector<2x128xf32>
    %93 = arith.addf %92, %91 : vector<2x128xf32>
    %94 = arith.divf %92, %93 : vector<2x128xf32>
    %95 = math.tanh %89 : vector<2x128xf32>
    %96 = vector.extract_strided_slice %94 {offsets = [0, 0], sizes = [2, 32], strides = [1, 1]} : vector<2x128xf32> to vector<2x32xf32>
    %97 = vector.extract_strided_slice %94 {offsets = [0, 32], sizes = [2, 32], strides = [1, 1]} : vector<2x128xf32> to vector<2x32xf32>
    %98 = vector.extract_strided_slice %95 {offsets = [0, 64], sizes = [2, 32], strides = [1, 1]} : vector<2x128xf32> to vector<2x32xf32>
    %99 = vector.extract_strided_slice %94 {offsets = [0, 96], sizes = [2, 32], strides = [1, 1]} : vector<2x128xf32> to vector<2x32xf32>
    %100 = arith.mulf %97, %83 : vector<2x32xf32>
    %101 = arith.mulf %96, %98 : vector<2x32xf32>
    %102 = arith.addf %100, %101 : vector<2x32xf32>
    %103 = math.tanh %102 : vector<2x32xf32>
    %104 = arith.mulf %99, %103 : vector<2x32xf32>
    %105 = vector.extract_strided_slice %6 {offsets = [0, 5, 0], sizes = [2, 1, 128], strides = [1, 1, 1]} : vector<2x8x128xf32> to vector<2x1x128xf32>
    %106 = vector.shape_cast %105 : vector<2x1x128xf32> to vector<2x128xf32>
    %cst_19 = arith.constant dense<0.000000e+00> : vector<2x128xf32>
    %107 = tpu.matmul %104, %7, %cst_19 {dimension_numbers = #tpu.dot_dimension_numbers<[1], [0], [0], [1], [0, 0, 1, 1], [], []>} : vector<2x32xf32>, vector<32x128xf32>, vector<2x128xf32> -> vector<2x128xf32>
    %108 = arith.addf %106, %107 : vector<2x128xf32>
    %109 = arith.negf %108 : vector<2x128xf32>
    %110 = math.exp %109 : vector<2x128xf32>
    %cst_20 = arith.constant 1.000000e+00 : f32
    %111 = vector.broadcast %cst_20 : f32 to vector<2x128xf32>
    %112 = arith.addf %111, %110 : vector<2x128xf32>
    %113 = arith.divf %111, %112 : vector<2x128xf32>
    %114 = math.tanh %108 : vector<2x128xf32>
    %115 = vector.extract_strided_slice %113 {offsets = [0, 0], sizes = [2, 32], strides = [1, 1]} : vector<2x128xf32> to vector<2x32xf32>
    %116 = vector.extract_strided_slice %113 {offsets = [0, 32], sizes = [2, 32], strides = [1, 1]} : vector<2x128xf32> to vector<2x32xf32>
    %117 = vector.extract_strided_slice %114 {offsets = [0, 64], sizes = [2, 32], strides = [1, 1]} : vector<2x128xf32> to vector<2x32xf32>
    %118 = vector.extract_strided_slice %113 {offsets = [0, 96], sizes = [2, 32], strides = [1, 1]} : vector<2x128xf32> to vector<2x32xf32>
    %119 = arith.mulf %116, %102 : vector<2x32xf32>
    %120 = arith.mulf %115, %117 : vector<2x32xf32>
    %121 = arith.addf %119, %120 : vector<2x32xf32>
    %122 = math.tanh %121 : vector<2x32xf32>
    %123 = arith.mulf %118, %122 : vector<2x32xf32>
    %124 = vector.extract_strided_slice %6 {offsets = [0, 6, 0], sizes = [2, 1, 128], strides = [1, 1, 1]} : vector<2x8x128xf32> to vector<2x1x128xf32>
    %125 = vector.shape_cast %124 : vector<2x1x128xf32> to vector<2x128xf32>
    %cst_21 = arith.constant dense<0.000000e+00> : vector<2x128xf32>
    %126 = tpu.matmul %123, %7, %cst_21 {dimension_numbers = #tpu.dot_dimension_numbers<[1], [0], [0], [1], [0, 0, 1, 1], [], []>} : vector<2x32xf32>, vector<32x128xf32>, vector<2x128xf32> -> vector<2x128xf32>
    %127 = arith.addf %125, %126 : vector<2x128xf32>
    %128 = arith.negf %127 : vector<2x128xf32>
    %129 = math.exp %128 : vector<2x128xf32>
    %cst_22 = arith.constant 1.000000e+00 : f32
    %130 = vector.broadcast %cst_22 : f32 to vector<2x128xf32>
    %131 = arith.addf %130, %129 : vector<2x128xf32>
    %132 = arith.divf %130, %131 : vector<2x128xf32>
    %133 = math.tanh %127 : vector<2x128xf32>
    %134 = vector.extract_strided_slice %132 {offsets = [0, 0], sizes = [2, 32], strides = [1, 1]} : vector<2x128xf32> to vector<2x32xf32>
    %135 = vector.extract_strided_slice %132 {offsets = [0, 32], sizes = [2, 32], strides = [1, 1]} : vector<2x128xf32> to vector<2x32xf32>
    %136 = vector.extract_strided_slice %133 {offsets = [0, 64], sizes = [2, 32], strides = [1, 1]} : vector<2x128xf32> to vector<2x32xf32>
    %137 = vector.extract_strided_slice %132 {offsets = [0, 96], sizes = [2, 32], strides = [1, 1]} : vector<2x128xf32> to vector<2x32xf32>
    %138 = arith.mulf %135, %121 : vector<2x32xf32>
    %139 = arith.mulf %134, %136 : vector<2x32xf32>
    %140 = arith.addf %138, %139 : vector<2x32xf32>
    %141 = math.tanh %140 : vector<2x32xf32>
    %142 = arith.mulf %137, %141 : vector<2x32xf32>
    %143 = vector.extract_strided_slice %6 {offsets = [0, 7, 0], sizes = [2, 1, 128], strides = [1, 1, 1]} : vector<2x8x128xf32> to vector<2x1x128xf32>
    %144 = vector.shape_cast %143 : vector<2x1x128xf32> to vector<2x128xf32>
    %cst_23 = arith.constant dense<0.000000e+00> : vector<2x128xf32>
    %145 = tpu.matmul %142, %7, %cst_23 {dimension_numbers = #tpu.dot_dimension_numbers<[1], [0], [0], [1], [0, 0, 1, 1], [], []>} : vector<2x32xf32>, vector<32x128xf32>, vector<2x128xf32> -> vector<2x128xf32>
    %146 = arith.addf %144, %145 : vector<2x128xf32>
    %147 = arith.negf %146 : vector<2x128xf32>
    %148 = math.exp %147 : vector<2x128xf32>
    %cst_24 = arith.constant 1.000000e+00 : f32
    %149 = vector.broadcast %cst_24 : f32 to vector<2x128xf32>
    %150 = arith.addf %149, %148 : vector<2x128xf32>
    %151 = arith.divf %149, %150 : vector<2x128xf32>
    %152 = math.tanh %146 : vector<2x128xf32>
    %153 = vector.extract_strided_slice %151 {offsets = [0, 0], sizes = [2, 32], strides = [1, 1]} : vector<2x128xf32> to vector<2x32xf32>
    %154 = vector.extract_strided_slice %151 {offsets = [0, 32], sizes = [2, 32], strides = [1, 1]} : vector<2x128xf32> to vector<2x32xf32>
    %155 = vector.extract_strided_slice %152 {offsets = [0, 64], sizes = [2, 32], strides = [1, 1]} : vector<2x128xf32> to vector<2x32xf32>
    %156 = vector.extract_strided_slice %151 {offsets = [0, 96], sizes = [2, 32], strides = [1, 1]} : vector<2x128xf32> to vector<2x32xf32>
    %157 = arith.mulf %154, %140 : vector<2x32xf32>
    %158 = arith.mulf %153, %155 : vector<2x32xf32>
    %159 = arith.addf %157, %158 : vector<2x32xf32>
    %160 = math.tanh %159 : vector<2x32xf32>
    %161 = arith.mulf %156, %160 : vector<2x32xf32>
    %c0_25 = arith.constant 0 : index
    %c0_26 = arith.constant 0 : index
    %162 = vector.load %arg5[%c0_25, %c0_26] : memref<1x32xf32, #tpu.memory_space<vmem>>, vector<1x32xf32>
    %163 = vector.broadcast %162 : vector<1x32xf32> to vector<2x32xf32>
    %164 = arith.mulf %161, %163 : vector<2x32xf32>
    %cst_27 = arith.constant dense<0.000000e+00> : vector<2xf32>
    %165 = vector.multi_reduction <add>, %164, %cst_27 [1] : vector<2x32xf32> to vector<2xf32>
    %166 = vector.shape_cast %165 : vector<2xf32> to vector<2x1xf32>
    %c0_28 = arith.constant 0 : index
    %c0_29 = arith.constant 0 : index
    %167 = vector.load %arg6[%c0_28, %c0_29] : memref<1x1xf32, #tpu.memory_space<vmem>>, vector<1x1xf32>
    %168 = vector.broadcast %167 : vector<1x1xf32> to vector<2x1xf32>
    %169 = arith.addf %166, %168 : vector<2x1xf32>
    %c0_30 = arith.constant 0 : index
    %c0_31 = arith.constant 0 : index
    %170 = vector.load %arg7[%c0_30, %c0_31] : memref<2x1xf32, #tpu.memory_space<vmem>>, vector<2x1xf32>
    tpu.vector_store %arg7[%c0_30, %c0_31], %169 {strides = array<i32>} : memref<2x1xf32, #tpu.memory_space<vmem>>, vector<2x1xf32>,
    return
  }
  func.func @transform_0(%arg0: i32) -> (i32, i32) {
    %c0_i32 = arith.constant 0 : i32
    %c0_i32_0 = arith.constant 0 : i32
    %c0_i32_1 = arith.constant 0 : i32
    return %c0_i32, %c0_i32_0 : i32, i32
  }
  func.func @transform_1(%arg0: i32) -> (i32, i32) {
    %c0_i32 = arith.constant 0 : i32
    %c0_i32_0 = arith.constant 0 : i32
    %c0_i32_1 = arith.constant 0 : i32
    return %c0_i32, %c0_i32_0 : i32, i32
  }
  func.func @transform_2(%arg0: i32) -> (i32, i32) {
    %c0_i32 = arith.constant 0 : i32
    %c0_i32_0 = arith.constant 0 : i32
    %c0_i32_1 = arith.constant 0 : i32
    return %c0_i32, %c0_i32_0 : i32, i32
  }
  func.func @transform_3(%arg0: i32) -> (i32, i32) {
    %c0_i32 = arith.constant 0 : i32
    %c0_i32_0 = arith.constant 0 : i32
    %c0_i32_1 = arith.constant 0 : i32
    return %c0_i32, %c0_i32_0 : i32, i32
  }
  func.func @transform_4(%arg0: i32) -> (i32, i32) {
    %c0_i32 = arith.constant 0 : i32
    %c0_i32_0 = arith.constant 0 : i32
    %c0_i32_1 = arith.constant 0 : i32
    return %c0_i32, %c0_i32_0 : i32, i32
  }
  func.func @transform_5(%arg0: i32) -> (i32, i32) {
    %c0_i32 = arith.constant 0 : i32
    %c0_i32_0 = arith.constant 0 : i32
    %c0_i32_1 = arith.constant 0 : i32
    return %c0_i32, %c0_i32_0 : i32, i32
  }
  func.func @transform_6(%arg0: i32) -> (i32, i32) {
    %c0_i32 = arith.constant 0 : i32
    %c0_i32_0 = arith.constant 0 : i32
    %c0_i32_1 = arith.constant 0 : i32
    return %c0_i32, %c0_i32_0 : i32, i32
  }
}

</mosaic_0001>

<llo_original>
// kernel: mylstm_forward.1
$region0: #{mylstm_forward.1}
  #allocation0 [shape = 'u32[]', space=smem, size = 0x4, offset = 0x4, fixed_abs, tag = 'smem constant byte address 0x4 - core index']
  #allocation1 [shape = 'u32[144,128]{1,0:T(1,128)}', space=vmem, size = 0x12000, scoped, tag = 'internal scratch']
  #allocation2 [shape = 'f32[1,1]{1,0:T(1,128)S(1)}', space=vmem, size = 0x200, scoped, tag = 'scoped memory for mylstm_forward.1']
  %s0 = inlined_call_operand.vmem [shape: f32[16,7], index: 0, kind: input, shape index: {}]
  %s1 = inlined_call_operand.vmem [shape: f32[7,128], index: 1, kind: input, shape index: {}]
  %s2 = inlined_call_operand.vmem [shape: f32[32,128], index: 2, kind: input, shape index: {}]
  %s3 = inlined_call_operand.vmem [shape: f32[1,128], index: 3, kind: input, shape index: {}]
  %s4 = inlined_call_operand.vmem [shape: f32[1,32], index: 4, kind: input, shape index: {}]
  %s5 = inlined_call_operand.<no memory space> [shape: f32[1,1], index: 5, kind: input, shape index: {}]
  %s6 = inlined_call_operand.vmem [shape: f32[2,1], index: 6, kind: output, shape index: {}]
  %s7 = sld [smem:[#allocation0]]
  $region34: #{mylstm_forward.1} parent=0
    _
  %s9 = ssub.s32 1, %s7
  %s10 = scalar_select 0, %s9, %s7
  %v11 = vstv %s5
  %12 = vst [vmem:[#allocation2] sm:$0x1] %v11
  // Predicated region
  $region2: #{mylstm_forward.1} parent=0 // pred_check
    _
  $region3: #{mylstm_forward.1} parent=0 // pred_check_branch
    %14 = sbr.rel (0) target = $region5
  $region4: #{mylstm_forward.1} parent=0 // pred_region
    _
  $region5: #{mylstm_forward.1} parent=0 // pred_fallthru
    _
  // Predicated region
  $region6: #{mylstm_forward.1} parent=0 // pred_check
    _
  $region7: #{mylstm_forward.1} parent=0 // pred_check_branch
    %16 = sbr.rel (0) target = $region9
  $region8: #{mylstm_forward.1} parent=0 // pred_region
    _
  $region9: #{mylstm_forward.1} parent=0 // pred_fallthru
    _
  // Predicated region
  $region10: #{mylstm_forward.1} parent=0 // pred_check
    _
  $region11: #{mylstm_forward.1} parent=0 // pred_check_branch
    %18 = sbr.rel (0) target = $region13
  $region12: #{mylstm_forward.1} parent=0 // pred_region
    _
  $region13: #{mylstm_forward.1} parent=0 // pred_fallthru
    _
  // Predicated region
  $region14: #{mylstm_forward.1} parent=0 // pred_check
    _
  $region15: #{mylstm_forward.1} parent=0 // pred_check_branch
    %20 = sbr.rel (0) target = $region17
  $region16: #{mylstm_forward.1} parent=0 // pred_region
    _
  $region17: #{mylstm_forward.1} parent=0 // pred_fallthru
    _
  // Predicated region
  $region18: #{mylstm_forward.1} parent=0 // pred_check
    _
  $region19: #{mylstm_forward.1} parent=0 // pred_check_branch
    %22 = sbr.rel (0) target = $region21
  $region20: #{mylstm_forward.1} parent=0 // pred_region
    _
  $region21: #{mylstm_forward.1} parent=0 // pred_fallthru
    _
  // Predicated region
  $region22: #{mylstm_forward.1} parent=0 // pred_check
    _
  $region23: #{mylstm_forward.1} parent=0 // pred_check_branch
    %24 = sbr.rel (0) target = $region25
  $region24: #{mylstm_forward.1} parent=0 // pred_region
    _
  $region25: #{mylstm_forward.1} parent=0 // pred_fallthru
    _
  %v25 = vld [vmem:[%s0] sm:$0xff]
  %v26 = vld [vmem:[%s0 + $0x8] sm:$0xff]
  %v27 = vld [vmem:[%s1] sm:$0x7f]
  %v28 = vld [vmem:[%s3] sm:$0x1]
  %v30 = vlaneseq
  %v31 = vshrl.u32 %v30, 7
  %v32 = vsub.s32 0, %v31
  %v33 = vrot.slane %v28, %v32
  %vm35 = vcmask 56320
  %v37 = vsel %vm35, %v25, 0
  %v40 = vsel %vm35, %v26, 0
  %vm42 = vcmask 1046528
  %v44 = vsel %vm42, %v27, 0
  %46 = vmatprep.subr.mxu0 0.0
  %47 = vmatpush1.msra.mxu0 %v44
  %48 = vmatprep.subr.mxu0 0.0
  %49 = vmatpush1.msra.mxu0 0.0
  %50 = vmatprep.subr.mxu0 0.0
  %51 = vmatpush1.msra.mxu0 0.0
  %52 = vmatprep.subr.mxu0 0.0
  %53 = vmatpush1.msra.mxu0 0.0
  %54 = vmatprep.subr.mxu0 0.0
  %55 = vmatpush1.msra.mxu0 0.0
  %56 = vmatprep.subr.mxu0 0.0
  %57 = vmatpush1.msra.mxu0 0.0
  %58 = vmatprep.subr.mxu0 0.0
  %59 = vmatpush1.msra.mxu0 0.0
  %60 = vmatprep.subr.mxu0 0.0
  %61 = vmatpush1.msra.mxu0 0.0
  %62 = vmatprep.subr.mxu0 0.0
  %63 = vmatpush1.msra.mxu0 0.0
  %64 = vmatprep.subr.mxu0 0.0
  %65 = vmatpush1.msra.mxu0 0.0
  %66 = vmatprep.subr.mxu0 0.0
  %67 = vmatpush1.msra.mxu0 0.0
  %68 = vmatprep.subr.mxu0 0.0
  %69 = vmatpush1.msra.mxu0 0.0
  %70 = vmatprep.subr.mxu0 0.0
  %71 = vmatpush1.msra.mxu0 0.0
  %72 = vmatprep.subr.mxu0 0.0
  %73 = vmatpush1.msra.mxu0 0.0
  %74 = vmatprep.subr.mxu0 0.0
  %75 = vmatpush1.msra.mxu0 0.0
  %76 = vmatprep.subr.mxu0 0.0
  %77 = vmatpush1.msra.mxu0 0.0
  %78 = vmatprep.subr.mxu0 0.0
  %79 = vmatpush1.msra.mxu0 0.0
  %80 = vmatprep.subr.mxu0 0.0
  %81 = vmatpush1.msra.mxu0 0.0
  %82 = vmatprep.subr.mxu0 0.0
  %83 = vmatpush1.msra.mxu0 0.0
  %84 = vmatprep.subr.mxu0 0.0
  %85 = vmatpush1.msra.mxu0 0.0
  %86 = vmatprep.subr.mxu0 0.0
  %87 = vmatpush1.msra.mxu0 0.0
  %88 = vmatprep.subr.mxu0 0.0
  %89 = vmatpush1.msra.mxu0 0.0
  %90 = vmatprep.subr.mxu0 0.0
  %91 = vmatpush1.msra.mxu0 0.0
  %92 = vmatprep.subr.mxu0 0.0
  %93 = vmatpush1.msra.mxu0 0.0
  %94 = vmatprep.subr.mxu0 0.0
  %95 = vmatpush1.msra.mxu0 0.0
  %96 = vmatprep.subr.mxu0 0.0
  %97 = vmatpush1.msra.mxu0 0.0
  %98 = vmatprep.subr.mxu0 0.0
  %99 = vmatpush1.msra.mxu0 0.0
  %100 = vmatprep.subr.mxu0 0.0
  %101 = vmatpush1.msra.mxu0 0.0
  %102 = vmatprep.subr.mxu0 0.0
  %103 = vmatpush1.msra.mxu0 0.0
  %104 = vmatprep.subr.mxu0 0.0
  %105 = vmatpush1.msra.mxu0 0.0
  %106 = vmatprep.subr.mxu0 0.0
  %107 = vmatpush1.msra.mxu0 0.0
  %108 = vmatprep.subr.mxu0 0.0
  %109 = vmatpush1.msra.mxu0 0.0
  %110 = vmatprep.mubr.f32.mxu0 0.0
  %111 = vmatmul.mubr.f32.gmra.mrb[0].mxu0 %v37
  %v112 = vpop.f32.mrb[0].mxu0
  %v113 = vadd.f32 %v33, %v112
  %v114 = vpop.f32.mrb[0].mxu0
  %115 = vmatprep.mubr.f32.mxu0 0.0
  %116 = vmatmul.mubr.f32.gmra.mrb[0].mxu0 %v40
  %v117 = vpop.f32.mrb[0].mxu0
  %v118 = vadd.f32 %v33, %v117
  %v119 = vpop.f32.mrb[0].mxu0
  %120 = vdwg.mxu0
  %v121 = vld [vmem:[%s2] sm:$0xff]
  %v122 = vld [vmem:[%s2 + $0x8] sm:$0xff]
  %v123 = vld [vmem:[%s2 + $0x10] sm:$0xff]
  %v124 = vld [vmem:[%s2 + $0x18] sm:$0xff]
  %vm125 = vcmask 261120
  %v127 = vsel %vm125, 0.0, 0
  %129 = vmatprep.subr.mxu0 0.0
  %130 = vmatpush1.msra.mxu0 %v121
  %131 = vmatprep.subr.mxu0 0.0
  %132 = vmatpush1.msra.mxu0 %v122
  %133 = vmatprep.subr.mxu0 0.0
  %134 = vmatpush1.msra.mxu0 %v123
  %135 = vmatprep.subr.mxu0 0.0
  %136 = vmatpush1.msra.mxu0 %v124
  %137 = vmatprep.subr.mxu0 0.0
  %138 = vmatpush1.msra.mxu0 0.0
  %139 = vmatprep.subr.mxu0 0.0
  %140 = vmatpush1.msra.mxu0 0.0
  %141 = vmatprep.subr.mxu0 0.0
  %142 = vmatpush1.msra.mxu0 0.0
  %143 = vmatprep.subr.mxu0 0.0
  %144 = vmatpush1.msra.mxu0 0.0
  %145 = vmatprep.subr.mxu0 0.0
  %146 = vmatpush1.msra.mxu0 0.0
  %147 = vmatprep.subr.mxu0 0.0
  %148 = vmatpush1.msra.mxu0 0.0
  %149 = vmatprep.subr.mxu0 0.0
  %150 = vmatpush1.msra.mxu0 0.0
  %151 = vmatprep.subr.mxu0 0.0
  %152 = vmatpush1.msra.mxu0 0.0
  %153 = vmatprep.subr.mxu0 0.0
  %154 = vmatpush1.msra.mxu0 0.0
  %155 = vmatprep.subr.mxu0 0.0
  %156 = vmatpush1.msra.mxu0 0.0
  %157 = vmatprep.subr.mxu0 0.0
  %158 = vmatpush1.msra.mxu0 0.0
  %159 = vmatprep.subr.mxu0 0.0
  %160 = vmatpush1.msra.mxu0 0.0
  %161 = vmatprep.subr.mxu0 0.0
  %162 = vmatpush1.msra.mxu0 0.0
  %163 = vmatprep.subr.mxu0 0.0
  %164 = vmatpush1.msra.mxu0 0.0
  %165 = vmatprep.subr.mxu0 0.0
  %166 = vmatpush1.msra.mxu0 0.0
  %167 = vmatprep.subr.mxu0 0.0
  %168 = vmatpush1.msra.mxu0 0.0
  %169 = vmatprep.subr.mxu0 0.0
  %170 = vmatpush1.msra.mxu0 0.0
  %171 = vmatprep.subr.mxu0 0.0
  %172 = vmatpush1.msra.mxu0 0.0
  %173 = vmatprep.subr.mxu0 0.0
  %174 = vmatpush1.msra.mxu0 0.0
  %175 = vmatprep.subr.mxu0 0.0
  %176 = vmatpush1.msra.mxu0 0.0
  %177 = vmatprep.subr.mxu0 0.0
  %178 = vmatpush1.msra.mxu0 0.0
  %179 = vmatprep.subr.mxu0 0.0
  %180 = vmatpush1.msra.mxu0 0.0
  %181 = vmatprep.subr.mxu0 0.0
  %182 = vmatpush1.msra.mxu0 0.0
  %183 = vmatprep.subr.mxu0 0.0
  %184 = vmatpush1.msra.mxu0 0.0
  %185 = vmatprep.subr.mxu0 0.0
  %186 = vmatpush1.msra.mxu0 0.0
  %187 = vmatprep.subr.mxu0 0.0
  %188 = vmatpush1.msra.mxu0 0.0
  %189 = vmatprep.subr.mxu0 0.0
  %190 = vmatpush1.msra.mxu0 0.0
  %191 = vmatprep.subr.mxu0 0.0
  %192 = vmatpush1.msra.mxu0 0.0
  %193 = vmatprep.mubr.f32.mxu0 0.0
  %194 = vmatmul.mubr.f32.gmra.mrb[0].mxu0 %v127
  %v195 = vpop.f32.mrb[0].mxu0
  %v196 = vadd.f32 0.0, %v195
  %v197 = vpop.f32.mrb[0].mxu0
  %198 = vdwg.mxu0
  %v200 = vrot.slane %v196, 1
  %v203 = vadd.f32 %v113, %v196
  %v204 = vadd.f32 %v118, %v200
  %v205 = vxor.u32 %v203, 2147483648
  %v206 = vxor.u32 %v204, 2147483648
  %v207 = vmul.f32 %v205, 1.442695
  %v208 = vpow.pop %v207
  %v209 = vmul.f32 %v206, 1.442695
  %v210 = vpow.pop %v209
  %v211 = vadd.f32 %v208, 1.0
  %v212 = vadd.f32 %v210, 1.0
  %v213 = vrcp.pop %v211
  %v214 = vmul.f32 1.0, %v213
  %v215 = vrcp.pop %v212
  %v216 = vmul.f32 1.0, %v215
  %v217 = vtanh.pop %v203
  %v218 = vtanh.pop %v204
  %v219 = vmul.f32 %v214, 0.0
  %v220 = vmul.f32 %v216, 0.0
  %223 = vrot.lane.b32.xlu0 %v217, 64
  %v224 = vpop.permute.xlu0 %223
  %225 = vrot.lane.b32.xlu0 %v218, 64
  %v226 = vpop.permute.xlu0 %225
  %v229 = vmul.f32 %v214, %v224
  %v230 = vmul.f32 %v216, %v226
  %233 = vrot.lane.b32.xlu0 %v229, 32
  %v234 = vpop.permute.xlu0 %233
  %235 = vrot.lane.b32.xlu0 %v230, 32
  %v236 = vpop.permute.xlu0 %235
  %v239 = vadd.f32 %v219, %v234
  %v240 = vadd.f32 %v220, %v236
  %v241 = vtanh.pop %v239
  %v242 = vtanh.pop %v240
  %245 = vrot.lane.b32.xlu0 %v241, 64
  %v246 = vpop.permute.xlu0 %245
  %247 = vrot.lane.b32.xlu0 %v242, 64
  %v248 = vpop.permute.xlu0 %247
  %v251 = vmul.f32 %v214, %v246
  %v252 = vmul.f32 %v216, %v248
  %v255 = vrot.slane %v252, 7
  %vm256 = vcmask 1041409
  %v257 = vsel %vm256, %v255, %v251
  %258 = vrot.lane.b32.xlu0 %v257, 32
  %v259 = vpop.permute.xlu0 %258
  %v260 = vsel %vm125, %v259, 0
  %262 = vmatprep.subr.mxu0 0.0
  %263 = vmatpush1.msra.mxu0 %v121
  %264 = vmatprep.subr.mxu0 0.0
  %265 = vmatpush1.msra.mxu0 %v122
  %266 = vmatprep.subr.mxu0 0.0
  %267 = vmatpush1.msra.mxu0 %v123
  %268 = vmatprep.subr.mxu0 0.0
  %269 = vmatpush1.msra.mxu0 %v124
  %270 = vmatprep.subr.mxu0 0.0
  %271 = vmatpush1.msra.mxu0 0.0
  %272 = vmatprep.subr.mxu0 0.0
  %273 = vmatpush1.msra.mxu0 0.0
  %274 = vmatprep.subr.mxu0 0.0
  %275 = vmatpush1.msra.mxu0 0.0
  %276 = vmatprep.subr.mxu0 0.0
  %277 = vmatpush1.msra.mxu0 0.0
  %278 = vmatprep.subr.mxu0 0.0
  %279 = vmatpush1.msra.mxu0 0.0
  %280 = vmatprep.subr.mxu0 0.0
  %281 = vmatpush1.msra.mxu0 0.0
  %282 = vmatprep.subr.mxu0 0.0
  %283 = vmatpush1.msra.mxu0 0.0
  %284 = vmatprep.subr.mxu0 0.0
  %285 = vmatpush1.msra.mxu0 0.0
  %286 = vmatprep.subr.mxu0 0.0
  %287 = vmatpush1.msra.mxu0 0.0
  %288 = vmatprep.subr.mxu0 0.0
  %289 = vmatpush1.msra.mxu0 0.0
  %290 = vmatprep.subr.mxu0 0.0
  %291 = vmatpush1.msra.mxu0 0.0
  %292 = vmatprep.subr.mxu0 0.0
  %293 = vmatpush1.msra.mxu0 0.0
  %294 = vmatprep.subr.mxu0 0.0
  %295 = vmatpush1.msra.mxu0 0.0
  %296 = vmatprep.subr.mxu0 0.0
  %297 = vmatpush1.msra.mxu0 0.0
  %298 = vmatprep.subr.mxu0 0.0
  %299 = vmatpush1.msra.mxu0 0.0
  %300 = vmatprep.subr.mxu0 0.0
  %301 = vmatpush1.msra.mxu0 0.0
  %302 = vmatprep.subr.mxu0 0.0
  %303 = vmatpush1.msra.mxu0 0.0
  %304 = vmatprep.subr.mxu0 0.0
  %305 = vmatpush1.msra.mxu0 0.0
  %306 = vmatprep.subr.mxu0 0.0
  %307 = vmatpush1.msra.mxu0 0.0
  %308 = vmatprep.subr.mxu0 0.0
  %309 = vmatpush1.msra.mxu0 0.0
  %310 = vmatprep.subr.mxu0 0.0
  %311 = vmatpush1.msra.mxu0 0.0
  %312 = vmatprep.subr.mxu0 0.0
  %313 = vmatpush1.msra.mxu0 0.0
  %314 = vmatprep.subr.mxu0 0.0
  %315 = vmatpush1.msra.mxu0 0.0
  %316 = vmatprep.subr.mxu0 0.0
  %317 = vmatpush1.msra.mxu0 0.0
  %318 = vmatprep.subr.mxu0 0.0
  %319 = vmatpush1.msra.mxu0 0.0
  %320 = vmatprep.subr.mxu0 0.0
  %321 = vmatpush1.msra.mxu0 0.0
  %322 = vmatprep.subr.mxu0 0.0
  %323 = vmatpush1.msra.mxu0 0.0
  %324 = vmatprep.subr.mxu0 0.0
  %325 = vmatpush1.msra.mxu0 0.0
  %326 = vmatprep.mubr.f32.mxu0 0.0
  %327 = vmatmul.mubr.f32.gmra.mrb[0].mxu0 %v260
  %v328 = vpop.f32.mrb[0].mxu0
  %v329 = vadd.f32 0.0, %v328
  %v330 = vpop.f32.mrb[0].mxu0
  %331 = vdwg.mxu0
  %v333 = vrot.slane %v329, 7
  %v336 = vadd.f32 %v113, %v333
  %v337 = vadd.f32 %v118, %v329
  %v338 = vxor.u32 %v336, 2147483648
  %v339 = vxor.u32 %v337, 2147483648
  %v340 = vmul.f32 %v338, 1.442695
  %v341 = vpow.pop %v340
  %v342 = vmul.f32 %v339, 1.442695
  %v343 = vpow.pop %v342
  %v344 = vadd.f32 %v341, 1.0
  %v345 = vadd.f32 %v343, 1.0
  %v346 = vrcp.pop %v344
  %v347 = vmul.f32 1.0, %v346
  %v348 = vrcp.pop %v345
  %v349 = vmul.f32 1.0, %v348
  %v350 = vtanh.pop %v336
  %v351 = vtanh.pop %v337
  %v354 = vrot.slane %v239, 7
  %v355 = vrot.slane %v240, 7
  %v358 = vmul.f32 %v347, %v354
  %v359 = vmul.f32 %v349, %v355
  %362 = vrot.lane.b32.xlu0 %v350, 64
  %v363 = vpop.permute.xlu0 %362
  %364 = vrot.lane.b32.xlu0 %v351, 64
  %v365 = vpop.permute.xlu0 %364
  %v368 = vmul.f32 %v347, %v363
  %v369 = vmul.f32 %v349, %v365
  %372 = vrot.lane.b32.xlu0 %v368, 32
  %v373 = vpop.permute.xlu0 %372
  %374 = vrot.lane.b32.xlu0 %v369, 32
  %v375 = vpop.permute.xlu0 %374
  %v378 = vadd.f32 %v358, %v373
  %v379 = vadd.f32 %v359, %v375
  %v380 = vtanh.pop %v378
  %v381 = vtanh.pop %v379
  %384 = vrot.lane.b32.xlu0 %v380, 64
  %v385 = vpop.permute.xlu0 %384
  %386 = vrot.lane.b32.xlu0 %v381, 64
  %v387 = vpop.permute.xlu0 %386
  %v390 = vmul.f32 %v347, %v385
  %v391 = vmul.f32 %v349, %v387
  %v394 = vrot.slane %v390, 1
  %v395 = vsel %vm256, %v391, %v394
  %396 = vrot.lane.b32.xlu0 %v395, 32
  %v397 = vpop.permute.xlu0 %396
  %v398 = vsel %vm125, %v397, 0
  %400 = vmatprep.subr.mxu0 0.0
  %401 = vmatpush1.msra.mxu0 %v121
  %402 = vmatprep.subr.mxu0 0.0
  %403 = vmatpush1.msra.mxu0 %v122
  %404 = vmatprep.subr.mxu0 0.0
  %405 = vmatpush1.msra.mxu0 %v123
  %406 = vmatprep.subr.mxu0 0.0
  %407 = vmatpush1.msra.mxu0 %v124
  %408 = vmatprep.subr.mxu0 0.0
  %409 = vmatpush1.msra.mxu0 0.0
  %410 = vmatprep.subr.mxu0 0.0
  %411 = vmatpush1.msra.mxu0 0.0
  %412 = vmatprep.subr.mxu0 0.0
  %413 = vmatpush1.msra.mxu0 0.0
  %414 = vmatprep.subr.mxu0 0.0
  %415 = vmatpush1.msra.mxu0 0.0
  %416 = vmatprep.subr.mxu0 0.0
  %417 = vmatpush1.msra.mxu0 0.0
  %418 = vmatprep.subr.mxu0 0.0
  %419 = vmatpush1.msra.mxu0 0.0
  %420 = vmatprep.subr.mxu0 0.0
  %421 = vmatpush1.msra.mxu0 0.0
  %422 = vmatprep.subr.mxu0 0.0
  %423 = vmatpush1.msra.mxu0 0.0
  %424 = vmatprep.subr.mxu0 0.0
  %425 = vmatpush1.msra.mxu0 0.0
  %426 = vmatprep.subr.mxu0 0.0
  %427 = vmatpush1.msra.mxu0 0.0
  %428 = vmatprep.subr.mxu0 0.0
  %429 = vmatpush1.msra.mxu0 0.0
  %430 = vmatprep.subr.mxu0 0.0
  %431 = vmatpush1.msra.mxu0 0.0
  %432 = vmatprep.subr.mxu0 0.0
  %433 = vmatpush1.msra.mxu0 0.0
  %434 = vmatprep.subr.mxu0 0.0
  %435 = vmatpush1.msra.mxu0 0.0
  %436 = vmatprep.subr.mxu0 0.0
  %437 = vmatpush1.msra.mxu0 0.0
  %438 = vmatprep.subr.mxu0 0.0
  %439 = vmatpush1.msra.mxu0 0.0
  %440 = vmatprep.subr.mxu0 0.0
  %441 = vmatpush1.msra.mxu0 0.0
  %442 = vmatprep.subr.mxu0 0.0
  %443 = vmatpush1.msra.mxu0 0.0
  %444 = vmatprep.subr.mxu0 0.0
  %445 = vmatpush1.msra.mxu0 0.0
  %446 = vmatprep.subr.mxu0 0.0
  %447 = vmatpush1.msra.mxu0 0.0
  %448 = vmatprep.subr.mxu0 0.0
  %449 = vmatpush1.msra.mxu0 0.0
  %450 = vmatprep.subr.mxu0 0.0
  %451 = vmatpush1.msra.mxu0 0.0
  %452 = vmatprep.subr.mxu0 0.0
  %453 = vmatpush1.msra.mxu0 0.0
  %454 = vmatprep.subr.mxu0 0.0
  %455 = vmatpush1.msra.mxu0 0.0
  %456 = vmatprep.subr.mxu0 0.0
  %457 = vmatpush1.msra.mxu0 0.0
  %458 = vmatprep.subr.mxu0 0.0
  %459 = vmatpush1.msra.mxu0 0.0
  %460 = vmatprep.subr.mxu0 0.0
  %461 = vmatpush1.msra.mxu0 0.0
  %462 = vmatprep.subr.mxu0 0.0
  %463 = vmatpush1.msra.mxu0 0.0
  %464 = vmatprep.mubr.f32.mxu0 0.0
  %465 = vmatmul.mubr.f32.gmra.mrb[0].mxu0 %v398
  %v466 = vpop.f32.mrb[0].mxu0
  %v467 = vadd.f32 0.0, %v466
  %v468 = vpop.f32.mrb[0].mxu0
  %469 = vdwg.mxu0
  %v471 = vrot.slane %v467, 6
  %v472 = vrot.slane %v467, 7
  %v475 = vadd.f32 %v113, %v471
  %v476 = vadd.f32 %v118, %v472
  %v477 = vxor.u32 %v475, 2147483648
  %v478 = vxor.u32 %v476, 2147483648
  %v479 = vmul.f32 %v477, 1.442695
  %v480 = vpow.pop %v479
  %v481 = vmul.f32 %v478, 1.442695
  %v482 = vpow.pop %v481
  %v483 = vadd.f32 %v480, 1.0
  %v484 = vadd.f32 %v482, 1.0
  %v485 = vrcp.pop %v483
  %v486 = vmul.f32 1.0, %v485
  %v487 = vrcp.pop %v484
  %v488 = vmul.f32 1.0, %v487
  %v489 = vtanh.pop %v475
  %v490 = vtanh.pop %v476
  %v493 = vrot.slane %v378, 7
  %v494 = vrot.slane %v379, 7
  %v497 = vmul.f32 %v486, %v493
  %v498 = vmul.f32 %v488, %v494
  %501 = vrot.lane.b32.xlu0 %v489, 64
  %v502 = vpop.permute.xlu0 %501
  %503 = vrot.lane.b32.xlu0 %v490, 64
  %v504 = vpop.permute.xlu0 %503
  %v507 = vmul.f32 %v486, %v502
  %v508 = vmul.f32 %v488, %v504
  %511 = vrot.lane.b32.xlu0 %v507, 32
  %v512 = vpop.permute.xlu0 %511
  %513 = vrot.lane.b32.xlu0 %v508, 32
  %v514 = vpop.permute.xlu0 %513
  %v517 = vadd.f32 %v497, %v512
  %v518 = vadd.f32 %v498, %v514
  %v519 = vtanh.pop %v517
  %v520 = vtanh.pop %v518
  %523 = vrot.lane.b32.xlu0 %v519, 64
  %v524 = vpop.permute.xlu0 %523
  %525 = vrot.lane.b32.xlu0 %v520, 64
  %v526 = vpop.permute.xlu0 %525
  %v529 = vmul.f32 %v486, %v524
  %v530 = vmul.f32 %v488, %v526
  %v533 = vrot.slane %v529, 2
  %v534 = vrot.slane %v530, 1
  %v535 = vsel %vm256, %v534, %v533
  %536 = vrot.lane.b32.xlu0 %v535, 32
  %v537 = vpop.permute.xlu0 %536
  %v538 = vsel %vm125, %v537, 0
  %540 = vmatprep.subr.mxu0 0.0
  %541 = vmatpush1.msra.mxu0 %v121
  %542 = vmatprep.subr.mxu0 0.0
  %543 = vmatpush1.msra.mxu0 %v122
  %544 = vmatprep.subr.mxu0 0.0
  %545 = vmatpush1.msra.mxu0 %v123
  %546 = vmatprep.subr.mxu0 0.0
  %547 = vmatpush1.msra.mxu0 %v124
  %548 = vmatprep.subr.mxu0 0.0
  %549 = vmatpush1.msra.mxu0 0.0
  %550 = vmatprep.subr.mxu0 0.0
  %551 = vmatpush1.msra.mxu0 0.0
  %552 = vmatprep.subr.mxu0 0.0
  %553 = vmatpush1.msra.mxu0 0.0
  %554 = vmatprep.subr.mxu0 0.0
  %555 = vmatpush1.msra.mxu0 0.0
  %556 = vmatprep.subr.mxu0 0.0
  %557 = vmatpush1.msra.mxu0 0.0
  %558 = vmatprep.subr.mxu0 0.0
  %559 = vmatpush1.msra.mxu0 0.0
  %560 = vmatprep.subr.mxu0 0.0
  %561 = vmatpush1.msra.mxu0 0.0
  %562 = vmatprep.subr.mxu0 0.0
  %563 = vmatpush1.msra.mxu0 0.0
  %564 = vmatprep.subr.mxu0 0.0
  %565 = vmatpush1.msra.mxu0 0.0
  %566 = vmatprep.subr.mxu0 0.0
  %567 = vmatpush1.msra.mxu0 0.0
  %568 = vmatprep.subr.mxu0 0.0
  %569 = vmatpush1.msra.mxu0 0.0
  %570 = vmatprep.subr.mxu0 0.0
  %571 = vmatpush1.msra.mxu0 0.0
  %572 = vmatprep.subr.mxu0 0.0
  %573 = vmatpush1.msra.mxu0 0.0
  %574 = vmatprep.subr.mxu0 0.0
  %575 = vmatpush1.msra.mxu0 0.0
  %576 = vmatprep.subr.mxu0 0.0
  %577 = vmatpush1.msra.mxu0 0.0
  %578 = vmatprep.subr.mxu0 0.0
  %579 = vmatpush1.msra.mxu0 0.0
  %580 = vmatprep.subr.mxu0 0.0
  %581 = vmatpush1.msra.mxu0 0.0
  %582 = vmatprep.subr.mxu0 0.0
  %583 = vmatpush1.msra.mxu0 0.0
  %584 = vmatprep.subr.mxu0 0.0
  %585 = vmatpush1.msra.mxu0 0.0
  %586 = vmatprep.subr.mxu0 0.0
  %587 = vmatpush1.msra.mxu0 0.0
  %588 = vmatprep.subr.mxu0 0.0
  %589 = vmatpush1.msra.mxu0 0.0
  %590 = vmatprep.subr.mxu0 0.0
  %591 = vmatpush1.msra.mxu0 0.0
  %592 = vmatprep.subr.mxu0 0.0
  %593 = vmatpush1.msra.mxu0 0.0
  %594 = vmatprep.subr.mxu0 0.0
  %595 = vmatpush1.msra.mxu0 0.0
  %596 = vmatprep.subr.mxu0 0.0
  %597 = vmatpush1.msra.mxu0 0.0
  %598 = vmatprep.subr.mxu0 0.0
  %599 = vmatpush1.msra.mxu0 0.0
  %600 = vmatprep.subr.mxu0 0.0
  %601 = vmatpush1.msra.mxu0 0.0
  %602 = vmatprep.subr.mxu0 0.0
  %603 = vmatpush1.msra.mxu0 0.0
  %604 = vmatprep.mubr.f32.mxu0 0.0
  %605 = vmatmul.mubr.f32.gmra.mrb[0].mxu0 %v538
  %v606 = vpop.f32.mrb[0].mxu0
  %v607 = vadd.f32 0.0, %v606
  %v608 = vpop.f32.mrb[0].mxu0
  %609 = vdwg.mxu0
  %v611 = vrot.slane %v607, 5
  %v612 = vrot.slane %v607, 6
  %v615 = vadd.f32 %v113, %v611
  %v616 = vadd.f32 %v118, %v612
  %v617 = vxor.u32 %v615, 2147483648
  %v618 = vxor.u32 %v616, 2147483648
  %v619 = vmul.f32 %v617, 1.442695
  %v620 = vpow.pop %v619
  %v621 = vmul.f32 %v618, 1.442695
  %v622 = vpow.pop %v621
  %v623 = vadd.f32 %v620, 1.0
  %v624 = vadd.f32 %v622, 1.0
  %v625 = vrcp.pop %v623
  %v626 = vmul.f32 1.0, %v625
  %v627 = vrcp.pop %v624
  %v628 = vmul.f32 1.0, %v627
  %v629 = vtanh.pop %v615
  %v630 = vtanh.pop %v616
  %v633 = vrot.slane %v517, 7
  %v634 = vrot.slane %v518, 7
  %v637 = vmul.f32 %v626, %v633
  %v638 = vmul.f32 %v628, %v634
  %641 = vrot.lane.b32.xlu0 %v629, 64
  %v642 = vpop.permute.xlu0 %641
  %643 = vrot.lane.b32.xlu0 %v630, 64
  %v644 = vpop.permute.xlu0 %643
  %v647 = vmul.f32 %v626, %v642
  %v648 = vmul.f32 %v628, %v644
  %651 = vrot.lane.b32.xlu0 %v647, 32
  %v652 = vpop.permute.xlu0 %651
  %653 = vrot.lane.b32.xlu0 %v648, 32
  %v654 = vpop.permute.xlu0 %653
  %v657 = vadd.f32 %v637, %v652
  %v658 = vadd.f32 %v638, %v654
  %v659 = vtanh.pop %v657
  %v660 = vtanh.pop %v658
  %663 = vrot.lane.b32.xlu0 %v659, 64
  %v664 = vpop.permute.xlu0 %663
  %665 = vrot.lane.b32.xlu0 %v660, 64
  %v666 = vpop.permute.xlu0 %665
  %v669 = vmul.f32 %v626, %v664
  %v670 = vmul.f32 %v628, %v666
  %v673 = vrot.slane %v669, 3
  %v674 = vrot.slane %v670, 2
  %v675 = vsel %vm256, %v674, %v673
  %676 = vrot.lane.b32.xlu0 %v675, 32
  %v677 = vpop.permute.xlu0 %676
  %v678 = vsel %vm125, %v677, 0
  %680 = vmatprep.subr.mxu0 0.0
  %681 = vmatpush1.msra.mxu0 %v121
  %682 = vmatprep.subr.mxu0 0.0
  %683 = vmatpush1.msra.mxu0 %v122
  %684 = vmatprep.subr.mxu0 0.0
  %685 = vmatpush1.msra.mxu0 %v123
  %686 = vmatprep.subr.mxu0 0.0
  %687 = vmatpush1.msra.mxu0 %v124
  %688 = vmatprep.subr.mxu0 0.0
  %689 = vmatpush1.msra.mxu0 0.0
  %690 = vmatprep.subr.mxu0 0.0
  %691 = vmatpush1.msra.mxu0 0.0
  %692 = vmatprep.subr.mxu0 0.0
  %693 = vmatpush1.msra.mxu0 0.0
  %694 = vmatprep.subr.mxu0 0.0
  %695 = vmatpush1.msra.mxu0 0.0
  %696 = vmatprep.subr.mxu0 0.0
  %697 = vmatpush1.msra.mxu0 0.0
  %698 = vmatprep.subr.mxu0 0.0
  %699 = vmatpush1.msra.mxu0 0.0
  %700 = vmatprep.subr.mxu0 0.0
  %701 = vmatpush1.msra.mxu0 0.0
  %702 = vmatprep.subr.mxu0 0.0
  %703 = vmatpush1.msra.mxu0 0.0
  %704 = vmatprep.subr.mxu0 0.0
  %705 = vmatpush1.msra.mxu0 0.0
  %706 = vmatprep.subr.mxu0 0.0
  %707 = vmatpush1.msra.mxu0 0.0
  %708 = vmatprep.subr.mxu0 0.0
  %709 = vmatpush1.msra.mxu0 0.0
  %710 = vmatprep.subr.mxu0 0.0
  %711 = vmatpush1.msra.mxu0 0.0
  %712 = vmatprep.subr.mxu0 0.0
  %713 = vmatpush1.msra.mxu0 0.0
  %714 = vmatprep.subr.mxu0 0.0
  %715 = vmatpush1.msra.mxu0 0.0
  %716 = vmatprep.subr.mxu0 0.0
  %717 = vmatpush1.msra.mxu0 0.0
  %718 = vmatprep.subr.mxu0 0.0
  %719 = vmatpush1.msra.mxu0 0.0
  %720 = vmatprep.subr.mxu0 0.0
  %721 = vmatpush1.msra.mxu0 0.0
  %722 = vmatprep.subr.mxu0 0.0
  %723 = vmatpush1.msra.mxu0 0.0
  %724 = vmatprep.subr.mxu0 0.0
  %725 = vmatpush1.msra.mxu0 0.0
  %726 = vmatprep.subr.mxu0 0.0
  %727 = vmatpush1.msra.mxu0 0.0
  %728 = vmatprep.subr.mxu0 0.0
  %729 = vmatpush1.msra.mxu0 0.0
  %730 = vmatprep.subr.mxu0 0.0
  %731 = vmatpush1.msra.mxu0 0.0
  %732 = vmatprep.subr.mxu0 0.0
  %733 = vmatpush1.msra.mxu0 0.0
  %734 = vmatprep.subr.mxu0 0.0
  %735 = vmatpush1.msra.mxu0 0.0
  %736 = vmatprep.subr.mxu0 0.0
  %737 = vmatpush1.msra.mxu0 0.0
  %738 = vmatprep.subr.mxu0 0.0
  %739 = vmatpush1.msra.mxu0 0.0
  %740 = vmatprep.subr.mxu0 0.0
  %741 = vmatpush1.msra.mxu0 0.0
  %742 = vmatprep.subr.mxu0 0.0
  %743 = vmatpush1.msra.mxu0 0.0
  %744 = vmatprep.mubr.f32.mxu0 0.0
  %745 = vmatmul.mubr.f32.gmra.mrb[0].mxu0 %v678
  %v746 = vpop.f32.mrb[0].mxu0
  %v747 = vadd.f32 0.0, %v746
  %v748 = vpop.f32.mrb[0].mxu0
  %749 = vdwg.mxu0
  %v751 = vrot.slane %v747, 4
  %v752 = vrot.slane %v747, 5
  %v755 = vadd.f32 %v113, %v751
  %v756 = vadd.f32 %v118, %v752
  %v757 = vxor.u32 %v755, 2147483648
  %v758 = vxor.u32 %v756, 2147483648
  %v759 = vmul.f32 %v757, 1.442695
  %v760 = vpow.pop %v759
  %v761 = vmul.f32 %v758, 1.442695
  %v762 = vpow.pop %v761
  %v763 = vadd.f32 %v760, 1.0
  %v764 = vadd.f32 %v762, 1.0
  %v765 = vrcp.pop %v763
  %v766 = vmul.f32 1.0, %v765
  %v767 = vrcp.pop %v764
  %v768 = vmul.f32 1.0, %v767
  %v769 = vtanh.pop %v755
  %v770 = vtanh.pop %v756
  %v773 = vrot.slane %v657, 7
  %v774 = vrot.slane %v658, 7
  %v777 = vmul.f32 %v766, %v773
  %v778 = vmul.f32 %v768, %v774
  %781 = vrot.lane.b32.xlu0 %v769, 64
  %v782 = vpop.permute.xlu0 %781
  %783 = vrot.lane.b32.xlu0 %v770, 64
  %v784 = vpop.permute.xlu0 %783
  %v787 = vmul.f32 %v766, %v782
  %v788 = vmul.f32 %v768, %v784
  %791 = vrot.lane.b32.xlu0 %v787, 32
  %v792 = vpop.permute.xlu0 %791
  %793 = vrot.lane.b32.xlu0 %v788, 32
  %v794 = vpop.permute.xlu0 %793
  %v797 = vadd.f32 %v777, %v792
  %v798 = vadd.f32 %v778, %v794
  %v799 = vtanh.pop %v797
  %v800 = vtanh.pop %v798
  %803 = vrot.lane.b32.xlu0 %v799, 64
  %v804 = vpop.permute.xlu0 %803
  %805 = vrot.lane.b32.xlu0 %v800, 64
  %v806 = vpop.permute.xlu0 %805
  %v809 = vmul.f32 %v766, %v804
  %v810 = vmul.f32 %v768, %v806
  %v813 = vrot.slane %v809, 4
  %v814 = vrot.slane %v810, 3
  %v815 = vsel %vm256, %v814, %v813
  %816 = vrot.lane.b32.xlu0 %v815, 32
  %v817 = vpop.permute.xlu0 %816
  %v818 = vsel %vm125, %v817, 0
  %820 = vmatprep.subr.mxu0 0.0
  %821 = vmatpush1.msra.mxu0 %v121
  %822 = vmatprep.subr.mxu0 0.0
  %823 = vmatpush1.msra.mxu0 %v122
  %824 = vmatprep.subr.mxu0 0.0
  %825 = vmatpush1.msra.mxu0 %v123
  %826 = vmatprep.subr.mxu0 0.0
  %827 = vmatpush1.msra.mxu0 %v124
  %828 = vmatprep.subr.mxu0 0.0
  %829 = vmatpush1.msra.mxu0 0.0
  %830 = vmatprep.subr.mxu0 0.0
  %831 = vmatpush1.msra.mxu0 0.0
  %832 = vmatprep.subr.mxu0 0.0
  %833 = vmatpush1.msra.mxu0 0.0
  %834 = vmatprep.subr.mxu0 0.0
  %835 = vmatpush1.msra.mxu0 0.0
  %836 = vmatprep.subr.mxu0 0.0
  %837 = vmatpush1.msra.mxu0 0.0
  %838 = vmatprep.subr.mxu0 0.0
  %839 = vmatpush1.msra.mxu0 0.0
  %840 = vmatprep.subr.mxu0 0.0
  %841 = vmatpush1.msra.mxu0 0.0
  %842 = vmatprep.subr.mxu0 0.0
  %843 = vmatpush1.msra.mxu0 0.0
  %844 = vmatprep.subr.mxu0 0.0
  %845 = vmatpush1.msra.mxu0 0.0
  %846 = vmatprep.subr.mxu0 0.0
  %847 = vmatpush1.msra.mxu0 0.0
  %848 = vmatprep.subr.mxu0 0.0
  %849 = vmatpush1.msra.mxu0 0.0
  %850 = vmatprep.subr.mxu0 0.0
  %851 = vmatpush1.msra.mxu0 0.0
  %852 = vmatprep.subr.mxu0 0.0
  %853 = vmatpush1.msra.mxu0 0.0
  %854 = vmatprep.subr.mxu0 0.0
  %855 = vmatpush1.msra.mxu0 0.0
  %856 = vmatprep.subr.mxu0 0.0
  %857 = vmatpush1.msra.mxu0 0.0
  %858 = vmatprep.subr.mxu0 0.0
  %859 = vmatpush1.msra.mxu0 0.0
  %860 = vmatprep.subr.mxu0 0.0
  %861 = vmatpush1.msra.mxu0 0.0
  %862 = vmatprep.subr.mxu0 0.0
  %863 = vmatpush1.msra.mxu0 0.0
  %864 = vmatprep.subr.mxu0 0.0
  %865 = vmatpush1.msra.mxu0 0.0
  %866 = vmatprep.subr.mxu0 0.0
  %867 = vmatpush1.msra.mxu0 0.0
  %868 = vmatprep.subr.mxu0 0.0
  %869 = vmatpush1.msra.mxu0 0.0
  %870 = vmatprep.subr.mxu0 0.0
  %871 = vmatpush1.msra.mxu0 0.0
  %872 = vmatprep.subr.mxu0 0.0
  %873 = vmatpush1.msra.mxu0 0.0
  %874 = vmatprep.subr.mxu0 0.0
  %875 = vmatpush1.msra.mxu0 0.0
  %876 = vmatprep.subr.mxu0 0.0
  %877 = vmatpush1.msra.mxu0 0.0
  %878 = vmatprep.subr.mxu0 0.0
  %879 = vmatpush1.msra.mxu0 0.0
  %880 = vmatprep.subr.mxu0 0.0
  %881 = vmatpush1.msra.mxu0 0.0
  %882 = vmatprep.subr.mxu0 0.0
  %883 = vmatpush1.msra.mxu0 0.0
  %884 = vmatprep.mubr.f32.mxu0 0.0
  %885 = vmatmul.mubr.f32.gmra.mrb[0].mxu0 %v818
  %v886 = vpop.f32.mrb[0].mxu0
  %v887 = vadd.f32 0.0, %v886
  %v888 = vpop.f32.mrb[0].mxu0
  %889 = vdwg.mxu0
  %v891 = vrot.slane %v887, 3
  %v892 = vrot.slane %v887, 4
  %v895 = vadd.f32 %v113, %v891
  %v896 = vadd.f32 %v118, %v892
  %v897 = vxor.u32 %v895, 2147483648
  %v898 = vxor.u32 %v896, 2147483648
  %v899 = vmul.f32 %v897, 1.442695
  %v900 = vpow.pop %v899
  %v901 = vmul.f32 %v898, 1.442695
  %v902 = vpow.pop %v901
  %v903 = vadd.f32 %v900, 1.0
  %v904 = vadd.f32 %v902, 1.0
  %v905 = vrcp.pop %v903
  %v906 = vmul.f32 1.0, %v905
  %v907 = vrcp.pop %v904
  %v908 = vmul.f32 1.0, %v907
  %v909 = vtanh.pop %v895
  %v910 = vtanh.pop %v896
  %v913 = vrot.slane %v797, 7
  %v914 = vrot.slane %v798, 7
  %v917 = vmul.f32 %v906, %v913
  %v918 = vmul.f32 %v908, %v914
  %921 = vrot.lane.b32.xlu0 %v909, 64
  %v922 = vpop.permute.xlu0 %921
  %923 = vrot.lane.b32.xlu0 %v910, 64
  %v924 = vpop.permute.xlu0 %923
  %v927 = vmul.f32 %v906, %v922
  %v928 = vmul.f32 %v908, %v924
  %931 = vrot.lane.b32.xlu0 %v927, 32
  %v932 = vpop.permute.xlu0 %931
  %933 = vrot.lane.b32.xlu0 %v928, 32
  %v934 = vpop.permute.xlu0 %933
  %v937 = vadd.f32 %v917, %v932
  %v938 = vadd.f32 %v918, %v934
  %v939 = vtanh.pop %v937
  %v940 = vtanh.pop %v938
  %943 = vrot.lane.b32.xlu0 %v939, 64
  %v944 = vpop.permute.xlu0 %943
  %945 = vrot.lane.b32.xlu0 %v940, 64
  %v946 = vpop.permute.xlu0 %945
  %v949 = vmul.f32 %v906, %v944
  %v950 = vmul.f32 %v908, %v946
  %v953 = vrot.slane %v949, 5
  %v954 = vrot.slane %v950, 4
  %v955 = vsel %vm256, %v954, %v953
  %956 = vrot.lane.b32.xlu0 %v955, 32
  %v957 = vpop.permute.xlu0 %956
  %v958 = vsel %vm125, %v957, 0
  %960 = vmatprep.subr.mxu0 0.0
  %961 = vmatpush1.msra.mxu0 %v121
  %962 = vmatprep.subr.mxu0 0.0
  %963 = vmatpush1.msra.mxu0 %v122
  %964 = vmatprep.subr.mxu0 0.0
  %965 = vmatpush1.msra.mxu0 %v123
  %966 = vmatprep.subr.mxu0 0.0
  %967 = vmatpush1.msra.mxu0 %v124
  %968 = vmatprep.subr.mxu0 0.0
  %969 = vmatpush1.msra.mxu0 0.0
  %970 = vmatprep.subr.mxu0 0.0
  %971 = vmatpush1.msra.mxu0 0.0
  %972 = vmatprep.subr.mxu0 0.0
  %973 = vmatpush1.msra.mxu0 0.0
  %974 = vmatprep.subr.mxu0 0.0
  %975 = vmatpush1.msra.mxu0 0.0
  %976 = vmatprep.subr.mxu0 0.0
  %977 = vmatpush1.msra.mxu0 0.0
  %978 = vmatprep.subr.mxu0 0.0
  %979 = vmatpush1.msra.mxu0 0.0
  %980 = vmatprep.subr.mxu0 0.0
  %981 = vmatpush1.msra.mxu0 0.0
  %982 = vmatprep.subr.mxu0 0.0
  %983 = vmatpush1.msra.mxu0 0.0
  %984 = vmatprep.subr.mxu0 0.0
  %985 = vmatpush1.msra.mxu0 0.0
  %986 = vmatprep.subr.mxu0 0.0
  %987 = vmatpush1.msra.mxu0 0.0
  %988 = vmatprep.subr.mxu0 0.0
  %989 = vmatpush1.msra.mxu0 0.0
  %990 = vmatprep.subr.mxu0 0.0
  %991 = vmatpush1.msra.mxu0 0.0
  %992 = vmatprep.subr.mxu0 0.0
  %993 = vmatpush1.msra.mxu0 0.0
  %994 = vmatprep.subr.mxu0 0.0
  %995 = vmatpush1.msra.mxu0 0.0
  %996 = vmatprep.subr.mxu0 0.0
  %997 = vmatpush1.msra.mxu0 0.0
  %998 = vmatprep.subr.mxu0 0.0
  %999 = vmatpush1.msra.mxu0 0.0
  %1000 = vmatprep.subr.mxu0 0.0
  %1001 = vmatpush1.msra.mxu0 0.0
  %1002 = vmatprep.subr.mxu0 0.0
  %1003 = vmatpush1.msra.mxu0 0.0
  %1004 = vmatprep.subr.mxu0 0.0
  %1005 = vmatpush1.msra.mxu0 0.0
  %1006 = vmatprep.subr.mxu0 0.0
  %1007 = vmatpush1.msra.mxu0 0.0
  %1008 = vmatprep.subr.mxu0 0.0
  %1009 = vmatpush1.msra.mxu0 0.0
  %1010 = vmatprep.subr.mxu0 0.0
  %1011 = vmatpush1.msra.mxu0 0.0
  %1012 = vmatprep.subr.mxu0 0.0
  %1013 = vmatpush1.msra.mxu0 0.0
  %1014 = vmatprep.subr.mxu0 0.0
  %1015 = vmatpush1.msra.mxu0 0.0
  %1016 = vmatprep.subr.mxu0 0.0
  %1017 = vmatpush1.msra.mxu0 0.0
  %1018 = vmatprep.subr.mxu0 0.0
  %1019 = vmatpush1.msra.mxu0 0.0
  %1020 = vmatprep.subr.mxu0 0.0
  %1021 = vmatpush1.msra.mxu0 0.0
  %1022 = vmatprep.subr.mxu0 0.0
  %1023 = vmatpush1.msra.mxu0 0.0
  %1024 = vmatprep.mubr.f32.mxu0 0.0
  %1025 = vmatmul.mubr.f32.gmra.mrb[0].mxu0 %v958
  %v1026 = vpop.f32.mrb[0].mxu0
  %v1027 = vadd.f32 0.0, %v1026
  %v1028 = vpop.f32.mrb[0].mxu0
  %1029 = vdwg.mxu0
  %v1031 = vrot.slane %v1027, 2
  %v1032 = vrot.slane %v1027, 3
  %v1035 = vadd.f32 %v113, %v1031
  %v1036 = vadd.f32 %v118, %v1032
  %v1037 = vxor.u32 %v1035, 2147483648
  %v1038 = vxor.u32 %v1036, 2147483648
  %v1039 = vmul.f32 %v1037, 1.442695
  %v1040 = vpow.pop %v1039
  %v1041 = vmul.f32 %v1038, 1.442695
  %v1042 = vpow.pop %v1041
  %v1043 = vadd.f32 %v1040, 1.0
  %v1044 = vadd.f32 %v1042, 1.0
  %v1045 = vrcp.pop %v1043
  %v1046 = vmul.f32 1.0, %v1045
  %v1047 = vrcp.pop %v1044
  %v1048 = vmul.f32 1.0, %v1047
  %v1049 = vtanh.pop %v1035
  %v1050 = vtanh.pop %v1036
  %v1053 = vrot.slane %v937, 7
  %v1054 = vrot.slane %v938, 7
  %v1057 = vmul.f32 %v1046, %v1053
  %v1058 = vmul.f32 %v1048, %v1054
  %1061 = vrot.lane.b32.xlu0 %v1049, 64
  %v1062 = vpop.permute.xlu0 %1061
  %1063 = vrot.lane.b32.xlu0 %v1050, 64
  %v1064 = vpop.permute.xlu0 %1063
  %v1067 = vmul.f32 %v1046, %v1062
  %v1068 = vmul.f32 %v1048, %v1064
  %1071 = vrot.lane.b32.xlu0 %v1067, 32
  %v1072 = vpop.permute.xlu0 %1071
  %1073 = vrot.lane.b32.xlu0 %v1068, 32
  %v1074 = vpop.permute.xlu0 %1073
  %v1077 = vadd.f32 %v1057, %v1072
  %v1078 = vadd.f32 %v1058, %v1074
  %v1079 = vtanh.pop %v1077
  %v1080 = vtanh.pop %v1078
  %1083 = vrot.lane.b32.xlu0 %v1079, 64
  %v1084 = vpop.permute.xlu0 %1083
  %1085 = vrot.lane.b32.xlu0 %v1080, 64
  %v1086 = vpop.permute.xlu0 %1085
  %v1089 = vmul.f32 %v1046, %v1084
  %v1090 = vmul.f32 %v1048, %v1086
  %v1093 = vrot.slane %v1089, 6
  %v1094 = vrot.slane %v1090, 5
  %v1095 = vsel %vm256, %v1094, %v1093
  %1096 = vrot.lane.b32.xlu0 %v1095, 32
  %v1097 = vpop.permute.xlu0 %1096
  %v1098 = vsel %vm125, %v1097, 0
  %1100 = vmatprep.subr.mxu0 0.0
  %1101 = vmatpush1.msra.mxu0 %v121
  %1102 = vmatprep.subr.mxu0 0.0
  %1103 = vmatpush1.msra.mxu0 %v122
  %1104 = vmatprep.subr.mxu0 0.0
  %1105 = vmatpush1.msra.mxu0 %v123
  %1106 = vmatprep.subr.mxu0 0.0
  %1107 = vmatpush1.msra.mxu0 %v124
  %1108 = vmatprep.subr.mxu0 0.0
  %1109 = vmatpush1.msra.mxu0 0.0
  %1110 = vmatprep.subr.mxu0 0.0
  %1111 = vmatpush1.msra.mxu0 0.0
  %1112 = vmatprep.subr.mxu0 0.0
  %1113 = vmatpush1.msra.mxu0 0.0
  %1114 = vmatprep.subr.mxu0 0.0
  %1115 = vmatpush1.msra.mxu0 0.0
  %1116 = vmatprep.subr.mxu0 0.0
  %1117 = vmatpush1.msra.mxu0 0.0
  %1118 = vmatprep.subr.mxu0 0.0
  %1119 = vmatpush1.msra.mxu0 0.0
  %1120 = vmatprep.subr.mxu0 0.0
  %1121 = vmatpush1.msra.mxu0 0.0
  %1122 = vmatprep.subr.mxu0 0.0
  %1123 = vmatpush1.msra.mxu0 0.0
  %1124 = vmatprep.subr.mxu0 0.0
  %1125 = vmatpush1.msra.mxu0 0.0
  %1126 = vmatprep.subr.mxu0 0.0
  %1127 = vmatpush1.msra.mxu0 0.0
  %1128 = vmatprep.subr.mxu0 0.0
  %1129 = vmatpush1.msra.mxu0 0.0
  %1130 = vmatprep.subr.mxu0 0.0
  %1131 = vmatpush1.msra.mxu0 0.0
  %1132 = vmatprep.subr.mxu0 0.0
  %1133 = vmatpush1.msra.mxu0 0.0
  %1134 = vmatprep.subr.mxu0 0.0
  %1135 = vmatpush1.msra.mxu0 0.0
  %1136 = vmatprep.subr.mxu0 0.0
  %1137 = vmatpush1.msra.mxu0 0.0
  %1138 = vmatprep.subr.mxu0 0.0
  %1139 = vmatpush1.msra.mxu0 0.0
  %1140 = vmatprep.subr.mxu0 0.0
  %1141 = vmatpush1.msra.mxu0 0.0
  %1142 = vmatprep.subr.mxu0 0.0
  %1143 = vmatpush1.msra.mxu0 0.0
  %1144 = vmatprep.subr.mxu0 0.0
  %1145 = vmatpush1.msra.mxu0 0.0
  %1146 = vmatprep.subr.mxu0 0.0
  %1147 = vmatpush1.msra.mxu0 0.0
  %1148 = vmatprep.subr.mxu0 0.0
  %1149 = vmatpush1.msra.mxu0 0.0
  %1150 = vmatprep.subr.mxu0 0.0
  %1151 = vmatpush1.msra.mxu0 0.0
  %1152 = vmatprep.subr.mxu0 0.0
  %1153 = vmatpush1.msra.mxu0 0.0
  %1154 = vmatprep.subr.mxu0 0.0
  %1155 = vmatpush1.msra.mxu0 0.0
  %1156 = vmatprep.subr.mxu0 0.0
  %1157 = vmatpush1.msra.mxu0 0.0
  %1158 = vmatprep.subr.mxu0 0.0
  %1159 = vmatpush1.msra.mxu0 0.0
  %1160 = vmatprep.subr.mxu0 0.0
  %1161 = vmatpush1.msra.mxu0 0.0
  %1162 = vmatprep.subr.mxu0 0.0
  %1163 = vmatpush1.msra.mxu0 0.0
  %1164 = vmatprep.mubr.f32.mxu0 0.0
  %1165 = vmatmul.mubr.f32.gmra.mrb[0].mxu0 %v1098
  %v1166 = vpop.f32.mrb[0].mxu0
  %v1167 = vadd.f32 0.0, %v1166
  %v1168 = vpop.f32.mrb[0].mxu0
  %1169 = vdwg.mxu0
  %v1171 = vrot.slane %v1167, 1
  %v1172 = vrot.slane %v1167, 2
  %v1175 = vadd.f32 %v113, %v1171
  %v1176 = vadd.f32 %v118, %v1172
  %v1177 = vxor.u32 %v1175, 2147483648
  %v1178 = vxor.u32 %v1176, 2147483648
  %v1179 = vmul.f32 %v1177, 1.442695
  %v1180 = vpow.pop %v1179
  %v1181 = vmul.f32 %v1178, 1.442695
  %v1182 = vpow.pop %v1181
  %v1183 = vadd.f32 %v1180, 1.0
  %v1184 = vadd.f32 %v1182, 1.0
  %v1185 = vrcp.pop %v1183
  %v1186 = vmul.f32 1.0, %v1185
  %v1187 = vrcp.pop %v1184
  %v1188 = vmul.f32 1.0, %v1187
  %v1189 = vtanh.pop %v1175
  %v1190 = vtanh.pop %v1176
  %v1193 = vrot.slane %v1077, 7
  %v1194 = vrot.slane %v1078, 7
  %v1197 = vmul.f32 %v1186, %v1193
  %v1198 = vmul.f32 %v1188, %v1194
  %1201 = vrot.lane.b32.xlu0 %v1189, 64
  %v1202 = vpop.permute.xlu0 %1201
  %1203 = vrot.lane.b32.xlu0 %v1190, 64
  %v1204 = vpop.permute.xlu0 %1203
  %v1207 = vmul.f32 %v1186, %v1202
  %v1208 = vmul.f32 %v1188, %v1204
  %1211 = vrot.lane.b32.xlu0 %v1207, 32
  %v1212 = vpop.permute.xlu0 %1211
  %1213 = vrot.lane.b32.xlu0 %v1208, 32
  %v1214 = vpop.permute.xlu0 %1213
  %v1217 = vadd.f32 %v1197, %v1212
  %v1218 = vadd.f32 %v1198, %v1214
  %v1219 = vtanh.pop %v1217
  %v1220 = vtanh.pop %v1218
  %1223 = vrot.lane.b32.xlu0 %v1219, 64
  %v1224 = vpop.permute.xlu0 %1223
  %1225 = vrot.lane.b32.xlu0 %v1220, 64
  %v1226 = vpop.permute.xlu0 %1225
  %v1229 = vmul.f32 %v1186, %v1224
  %v1230 = vmul.f32 %v1188, %v1226
  %v1231 = vld [vmem:[%s4] sm:$0x1]
  %v1233 = vlaneseq
  %v1234 = vshrl.u32 %v1233, 7
  %v1235 = vsub.s32 0, %v1234
  %v1236 = vrot.slane %v1231, %v1235
  %1237 = vrot.lane.b32.xlu0 %v1236, 96
  %v1238 = vpop.permute.xlu0 %1237
  %v1240 = vmul.f32 %v1229, %v1238
  %v1241 = vmul.f32 %v1230, %v1238
  %v1244 = vrot.slane %v1241, 7
  %1245 = vrot.lane.b32.xlu0 %v1240, 32
  %v1246 = vpop.permute.xlu0 %1245
  %1247 = vrot.lane.b32.xlu0 %v1244, 32
  %v1248 = vpop.permute.xlu0 %1247
  %vm1251 = vcmask 261127
  %v1252 = vsel %vm1251, %v1246, 0.0
  %1253 = vadd.xlane.f32.xlu0 %v1252
  %v1254 = vpop.xlane.xlu0 %1253
  %vm1255 = vcmask 253952
  %v1256 = vsel %vm1255, %v1248, 0.0
  %1257 = vadd.xlane.f32.xlu0 %v1256
  %v1258 = vpop.xlane.xlu0 %1257
  %v1259 = vld [vmem:[#allocation2] sm:$0x1]
  %v1261 = vlaneseq
  %v1262 = vshrl.u32 %v1261, 7
  %v1263 = vsub.s32 0, %v1262
  %v1264 = vrot.slane %v1259, %v1263
  %v1266 = vadd.f32 %v1254, %v1264
  %v1267 = vadd.f32 %v1258, %v1264
  %vm1268 = vcmask 7175
  %1269 = vst.msk [vmem:[%s6 - $0x7] sm:$0x80] %vm1268, %v1266
  %vm1270 = vcmask 0
  %1271 = vst.msk [vmem:[%s6 + $0x1] sm:$0x1] %vm1270, %v1267
  // Predicated region
  $region26: #{mylstm_forward.1} parent=0 // pred_check
    _
  $region27: #{mylstm_forward.1} parent=0 // pred_check_branch
    %1273 = sbr.rel (0) target = $region29
  $region28: #{mylstm_forward.1} parent=0 // pred_region
    _
  $region29: #{mylstm_forward.1} parent=0 // pred_fallthru
    _
  // Predicated region
  $region30: #{mylstm_forward.1} parent=0 // pred_check
    _
  $region31: #{mylstm_forward.1} parent=0 // pred_check_branch
    %1275 = sbr.rel (0) target = $region33
  $region32: #{mylstm_forward.1} parent=0 // pred_region
    _
  $region33: #{mylstm_forward.1} parent=0 // pred_fallthru
    _

</llo_original>
